<compile_context>
chip_gen: v5e
topology: v5e:2x2
jax: 0.10.0
libtpu: 0.0.40
codegen_flags: <defaults>
</compile_context>

<pallas_src>
import functools

import jax
import jax.numpy as jnp
from jax import lax
from jax.experimental import pallas as pl
from jax.experimental.pallas import tpu as pltpu


def _edge_map_kernel(img_ref, out_ref, *, scale: float):
    # img_ref block: (1, C, H, W); out_ref block: (1, 1, H, W)
    _, C, H, W = img_ref.shape
    f32 = jnp.float32

    # ---- channel-wise |forward difference| accumulation (f32) --------------
    gx = jnp.zeros((H, W), f32)   # sum_c |img[h+1,w] - img[h,w]|  (row H-1 = wrap garbage)
    gy = jnp.zeros((H, W), f32)   # sum_c |img[h,w+1] - img[h,w]|  (col W-1 = wrap garbage)
    for c in range(C):
        ch = img_ref[0, c].astype(f32)                    # (H, W)
        dn = pltpu.roll(ch, shift=H - 1, axis=0) - ch     # ch[h+1] - ch[h] (wraps at H-1)
        dr = pltpu.roll(ch, shift=W - 1, axis=1) - ch     # ch[w+1] - ch[w] (wraps at W-1)
        gx = gx + jnp.abs(dn)
        gy = gy + jnp.abs(dr)

    # ---- tiny boundary factor vectors ((H,1) / (1,W)) -----------------------
    h_idx = lax.broadcasted_iota(jnp.int32, (H, 1), 0)
    w_idx = lax.broadcasted_iota(jnp.int32, (1, W), 1)
    valid_h = (h_idx < H - 1).astype(f32)     # zeroes the wrapped last row of gx
    valid_w = (w_idx < W - 1).astype(f32)     # zeroes the wrapped last col of gy
    fac_h = jnp.where((h_idx == 0) | (h_idx == H - 1), f32(1.0), f32(0.5))
    fac_w = jnp.where((w_idx == 0) | (w_idx == W - 1), f32(1.0), f32(0.5))
    if scale != 1.0:
        inv = f32(1.0 / abs(scale))           # divide-before-abs == mult by 1/|s| after abs
        fac_h = fac_h * inv
        fac_w = fac_w * inv

    gx = gx * valid_h
    gy = gy * valid_w
    # gradX[h] = gx[h] + gx[h-1]   (wrap at h==0 lands on the zeroed last row)
    grad_x = (gx + pltpu.roll(gx, shift=1, axis=0)) * fac_h
    grad_y = (gy + pltpu.roll(gy, shift=1, axis=1)) * fac_w

    out_ref[0, 0] = (grad_x + grad_y).astype(out_ref.dtype)


def edge_map(img: jax.Array, scale: float = 1.0) -> jax.Array:
    """Pallas TPU implementation of EdgeMap.forward (NCHW input)."""
    N, C, H, W = img.shape
    kernel = functools.partial(_edge_map_kernel, scale=float(scale))

    # Scoped-VMEM budget: double-buffered input + output blocks plus a few
    # (H, W) f32 intermediates, clamped to a safe range.
    itemsize = img.dtype.itemsize
    needed = 2 * (C * H * W * itemsize) + 2 * (H * W * itemsize) + 8 * H * W * 4 + (2 << 20)
    vmem_limit = int(min(max(needed, 32 * 1024 * 1024), 100 * 1024 * 1024))

    return pl.pallas_call(
        kernel,
        out_shape=jax.ShapeDtypeStruct((N, 1, H, W), img.dtype),
        grid_spec=pltpu.PrefetchScalarGridSpec(
            num_scalar_prefetch=0,
            grid=(N,),
            in_specs=[pl.BlockSpec((1, C, H, W), lambda n: (n, 0, 0, 0))],
            out_specs=pl.BlockSpec((1, 1, H, W), lambda n: (n, 0, 0, 0)),
        ),
        compiler_params=pltpu.CompilerParams(
            dimension_semantics=("parallel",),
            vmem_limit_bytes=vmem_limit),
    )(img)


def _edge_map_ref(img: jax.Array, scale: float = 1.0) -> jax.Array:
    """Pure-JAX reference mirroring the PyTorch module exactly."""
    img = img / scale
    N, C, H, W = img.shape
    gradx = jnp.sum(jnp.abs(img[:, :, 1:, :] - img[:, :, :-1, :]), axis=1, keepdims=True)
    grady = jnp.sum(jnp.abs(img[:, :, :, 1:] - img[:, :, :, :-1]), axis=1, keepdims=True)
    gradX = jnp.zeros((N, 1, H, W), img.dtype)
    gradY = jnp.zeros((N, 1, H, W), img.dtype)
    gradX = gradX.at[:, :, :-1, :].add(gradx)
    gradX = gradX.at[:, :, 1:, :].add(gradx)
    gradX = gradX.at[:, :, 1:-1, :].divide(2)
    gradY = gradY.at[:, :, :, :-1].add(grady)
    gradY = gradY.at[:, :, :, 1:].add(grady)
    gradY = gradY.at[:, :, :, 1:-1].divide(2)
    return gradX + gradY


if __name__ == "__main__":
    key = jax.random.PRNGKey(0)
    # W is a multiple of 128 so the output block is lane-dense (unmasked stores).
    N, C, H, W = 2, 4, 16, 128
    img = jax.random.uniform(key, (N, C, H, W), dtype=jnp.float32)

    for scale in (1.0, 2.5, -2.0):
        out = jax.block_until_ready(edge_map(img, scale=scale))
        ref = _edge_map_ref(img, scale=scale)
        assert out.shape == (N, 1, H, W), out.shape
        assert jnp.allclose(out, ref, atol=1e-5, rtol=1e-5), f"mismatch vs reference (scale={scale})"

    print("KERNEL_OK")
</pallas_src>

<mosaic_0001>
module attributes {stable_mosaic.version = 11 : i64} {
  func.func @_edge_map_kernel(%arg0: i32, %arg1: memref<1x4x16x128xf32, #tpu.memory_space<vmem>>, %arg2: memref<1x1x16x128xf32, #tpu.memory_space<vmem>>) attributes {dimension_semantics = [#tpu.dimension_semantics<parallel>], iteration_bounds = array<i64: 2>, scalar_prefetch = 0 : i64, scratch_operands = 0 : i64, tpu.core_type = #tpu.core_type<tc>, window_params = [{transform_indices = @transform_0, window_bounds = array<i64: 1, 4, 16, 128>}, {transform_indices = @transform_1, window_bounds = array<i64: 1, 1, 16, 128>}]} {
    %cst = arith.constant 0.000000e+00 : f32
    %0 = vector.broadcast %cst : f32 to vector<16x128xf32>
    %cst_0 = arith.constant 0.000000e+00 : f32
    %1 = vector.broadcast %cst_0 : f32 to vector<16x128xf32>
    %c0 = arith.constant 0 : index
    %c0_1 = arith.constant 0 : index
    %c0_2 = arith.constant 0 : index
    %c0_3 = arith.constant 0 : index
    %2 = vector.load %arg1[%c0, %c0_1, %c0_2, %c0_3] : memref<1x4x16x128xf32, #tpu.memory_space<vmem>>, vector<1x1x16x128xf32>
    %3 = vector.shape_cast %2 : vector<1x1x16x128xf32> to vector<16x128xf32>
    %c15_i32 = arith.constant 15 : i32
    %4 = tpu.dynamic_rotate %3 by %c15_i32 dim 0 : vector<16x128xf32>, i32 -> vector<16x128xf32>
    %5 = arith.subf %4, %3 : vector<16x128xf32>
    %c127_i32 = arith.constant 127 : i32
    %6 = tpu.dynamic_rotate %3 by %c127_i32 dim 1 : vector<16x128xf32>, i32 -> vector<16x128xf32>
    %7 = arith.subf %6, %3 : vector<16x128xf32>
    %8 = math.absf %5 : vector<16x128xf32>
    %9 = arith.addf %0, %8 : vector<16x128xf32>
    %10 = math.absf %7 : vector<16x128xf32>
    %11 = arith.addf %1, %10 : vector<16x128xf32>
    %c0_4 = arith.constant 0 : index
    %c1 = arith.constant 1 : index
    %c0_5 = arith.constant 0 : index
    %c0_6 = arith.constant 0 : index
    %12 = vector.load %arg1[%c0_4, %c1, %c0_5, %c0_6] : memref<1x4x16x128xf32, #tpu.memory_space<vmem>>, vector<1x1x16x128xf32>
    %13 = vector.shape_cast %12 : vector<1x1x16x128xf32> to vector<16x128xf32>
    %c15_i32_7 = arith.constant 15 : i32
    %14 = tpu.dynamic_rotate %13 by %c15_i32_7 dim 0 : vector<16x128xf32>, i32 -> vector<16x128xf32>
    %15 = arith.subf %14, %13 : vector<16x128xf32>
    %c127_i32_8 = arith.constant 127 : i32
    %16 = tpu.dynamic_rotate %13 by %c127_i32_8 dim 1 : vector<16x128xf32>, i32 -> vector<16x128xf32>
    %17 = arith.subf %16, %13 : vector<16x128xf32>
    %18 = math.absf %15 : vector<16x128xf32>
    %19 = arith.addf %9, %18 : vector<16x128xf32>
    %20 = math.absf %17 : vector<16x128xf32>
    %21 = arith.addf %11, %20 : vector<16x128xf32>
    %c0_9 = arith.constant 0 : index
    %c2 = arith.constant 2 : index
    %c0_10 = arith.constant 0 : index
    %c0_11 = arith.constant 0 : index
    %22 = vector.load %arg1[%c0_9, %c2, %c0_10, %c0_11] : memref<1x4x16x128xf32, #tpu.memory_space<vmem>>, vector<1x1x16x128xf32>
    %23 = vector.shape_cast %22 : vector<1x1x16x128xf32> to vector<16x128xf32>
    %c15_i32_12 = arith.constant 15 : i32
    %24 = tpu.dynamic_rotate %23 by %c15_i32_12 dim 0 : vector<16x128xf32>, i32 -> vector<16x128xf32>
    %25 = arith.subf %24, %23 : vector<16x128xf32>
    %c127_i32_13 = arith.constant 127 : i32
    %26 = tpu.dynamic_rotate %23 by %c127_i32_13 dim 1 : vector<16x128xf32>, i32 -> vector<16x128xf32>
    %27 = arith.subf %26, %23 : vector<16x128xf32>
    %28 = math.absf %25 : vector<16x128xf32>
    %29 = arith.addf %19, %28 : vector<16x128xf32>
    %30 = math.absf %27 : vector<16x128xf32>
    %31 = arith.addf %21, %30 : vector<16x128xf32>
    %c0_14 = arith.constant 0 : index
    %c3 = arith.constant 3 : index
    %c0_15 = arith.constant 0 : index
    %c0_16 = arith.constant 0 : index
    %32 = vector.load %arg1[%c0_14, %c3, %c0_15, %c0_16] : memref<1x4x16x128xf32, #tpu.memory_space<vmem>>, vector<1x1x16x128xf32>
    %33 = vector.shape_cast %32 : vector<1x1x16x128xf32> to vector<16x128xf32>
    %c15_i32_17 = arith.constant 15 : i32
    %34 = tpu.dynamic_rotate %33 by %c15_i32_17 dim 0 : vector<16x128xf32>, i32 -> vector<16x128xf32>
    %35 = arith.subf %34, %33 : vector<16x128xf32>
    %c127_i32_18 = arith.constant 127 : i32
    %36 = tpu.dynamic_rotate %33 by %c127_i32_18 dim 1 : vector<16x128xf32>, i32 -> vector<16x128xf32>
    %37 = arith.subf %36, %33 : vector<16x128xf32>
    %38 = math.absf %35 : vector<16x128xf32>
    %39 = arith.addf %29, %38 : vector<16x128xf32>
    %40 = math.absf %37 : vector<16x128xf32>
    %41 = arith.addf %31, %40 : vector<16x128xf32>
    %42 = tpu.iota {dimensions = array<i32: 0>} : vector<16x1xi32>
    %43 = tpu.iota {dimensions = array<i32: 1>} : vector<1x128xi32>
    %c15_i32_19 = arith.constant 15 : i32
    %44 = vector.broadcast %c15_i32_19 : i32 to vector<16x1xi32>
    %45 = arith.cmpi slt, %42, %44 : vector<16x1xi32>
    %46 = arith.extui %45 : vector<16x1xi1> to vector<16x1xi32>
    %47 = arith.sitofp %46 : vector<16x1xi32> to vector<16x1xf32>
    %c127_i32_20 = arith.constant 127 : i32
    %48 = vector.broadcast %c127_i32_20 : i32 to vector<1x128xi32>
    %49 = arith.cmpi slt, %43, %48 : vector<1x128xi32>
    %50 = arith.extui %49 : vector<1x128xi1> to vector<1x128xi32>
    %51 = arith.sitofp %50 : vector<1x128xi32> to vector<1x128xf32>
    %c0_i32 = arith.constant 0 : i32
    %52 = vector.broadcast %c0_i32 : i32 to vector<16x1xi32>
    %53 = arith.cmpi eq, %42, %52 : vector<16x1xi32>
    %c15_i32_21 = arith.constant 15 : i32
    %54 = vector.broadcast %c15_i32_21 : i32 to vector<16x1xi32>
    %55 = arith.cmpi eq, %42, %54 : vector<16x1xi32>
    %56 = arith.ori %53, %55 : vector<16x1xi1>
    %cst_22 = arith.constant 1.000000e+00 : f32
    %cst_23 = arith.constant 5.000000e-01 : f32
    %57 = vector.broadcast %cst_22 : f32 to vector<16x1xf32>
    %58 = vector.broadcast %cst_23 : f32 to vector<16x1xf32>
    %59 = arith.select %56, %57, %58 : vector<16x1xi1>, vector<16x1xf32>
    %c0_i32_24 = arith.constant 0 : i32
    %60 = vector.broadcast %c0_i32_24 : i32 to vector<1x128xi32>
    %61 = arith.cmpi eq, %43, %60 : vector<1x128xi32>
    %c127_i32_25 = arith.constant 127 : i32
    %62 = vector.broadcast %c127_i32_25 : i32 to vector<1x128xi32>
    %63 = arith.cmpi eq, %43, %62 : vector<1x128xi32>
    %64 = arith.ori %61, %63 : vector<1x128xi1>
    %cst_26 = arith.constant 1.000000e+00 : f32
    %cst_27 = arith.constant 5.000000e-01 : f32
    %65 = vector.broadcast %cst_26 : f32 to vector<1x128xf32>
    %66 = vector.broadcast %cst_27 : f32 to vector<1x128xf32>
    %67 = arith.select %64, %65, %66 : vector<1x128xi1>, vector<1x128xf32>
    %68 = vector.broadcast %47 : vector<16x1xf32> to vector<16x128xf32>
    %69 = arith.mulf %39, %68 : vector<16x128xf32>
    %70 = vector.broadcast %51 : vector<1x128xf32> to vector<16x128xf32>
    %71 = arith.mulf %41, %70 : vector<16x128xf32>
    %c1_i32 = arith.constant 1 : i32
    %72 = tpu.dynamic_rotate %69 by %c1_i32 dim 0 : vector<16x128xf32>, i32 -> vector<16x128xf32>
    %73 = arith.addf %69, %72 : vector<16x128xf32>
    %74 = vector.broadcast %59 : vector<16x1xf32> to vector<16x128xf32>
    %75 = arith.mulf %73, %74 : vector<16x128xf32>
    %c1_i32_28 = arith.constant 1 : i32
    %76 = tpu.dynamic_rotate %71 by %c1_i32_28 dim 1 : vector<16x128xf32>, i32 -> vector<16x128xf32>
    %77 = arith.addf %71, %76 : vector<16x128xf32>
    %78 = vector.broadcast %67 : vector<1x128xf32> to vector<16x128xf32>
    %79 = arith.mulf %77, %78 : vector<16x128xf32>
    %80 = arith.addf %75, %79 : vector<16x128xf32>
    %c0_29 = arith.constant 0 : index
    %c0_30 = arith.constant 0 : index
    %c0_31 = arith.constant 0 : index
    %c0_32 = arith.constant 0 : index
    %81 = vector.load %arg2[%c0_29, %c0_30, %c0_31, %c0_32] : memref<1x1x16x128xf32, #tpu.memory_space<vmem>>, vector<1x1x16x128xf32>
    %82 = vector.shape_cast %81 : vector<1x1x16x128xf32> to vector<16x128xf32>
    %83 = vector.shape_cast %80 : vector<16x128xf32> to vector<1x1x16x128xf32>
    tpu.vector_store %arg2[%c0_29, %c0_30, %c0_31, %c0_32], %83 {strides = array<i32>} : memref<1x1x16x128xf32, #tpu.memory_space<vmem>>, vector<1x1x16x128xf32>,
    return
  }
  func.func @transform_0(%arg0: i32) -> (i32, i32, i32, i32) {
    %c0_i32 = arith.constant 0 : i32
    %c0_i32_0 = arith.constant 0 : i32
    %c0_i32_1 = arith.constant 0 : i32
    %c0_i32_2 = arith.constant 0 : i32
    return %arg0, %c0_i32, %c0_i32_0, %c0_i32_1 : i32, i32, i32, i32
  }
  func.func @transform_1(%arg0: i32) -> (i32, i32, i32, i32) {
    %c0_i32 = arith.constant 0 : i32
    %c0_i32_0 = arith.constant 0 : i32
    %c0_i32_1 = arith.constant 0 : i32
    %c0_i32_2 = arith.constant 0 : i32
    return %arg0, %c0_i32, %c0_i32_0, %c0_i32_1 : i32, i32, i32, i32
  }
}

</mosaic_0001>

<llo_original>
// kernel: tpu_custom_call.1
$region0: #{tpu_custom_call.1}
  #allocation0 [shape = 'u32[]', space=smem, size = 0x4, offset = 0x4, fixed_abs, tag = 'smem constant byte address 0x4 - core index']
  #allocation1 [shape = 'u32[72,128]{1,0:T(1,128)}', space=vmem, size = 0x9000, scoped, tag = 'internal scratch']
  %s0 = inlined_call_operand.hbm [shape: f32[2,4,16,128], index: 0, kind: input, shape index: {}]
  %s1 = inlined_call_operand.hbm [shape: f32[2,1,16,128], index: 1, kind: output, shape index: {}]
  %s2 = sld [smem:[#allocation0]]
  $region41: #{tpu_custom_call.1} parent=0
    _
  %s4 = ssub.s32 1, %s2
  %s5 = scalar_select 0, %s4, %s2
  $region1: #{tpu_custom_call.1} parent=0
    #allocation2 [shape = 'u8[65536]{0}', space=vmem, size = 0x10000, scoped, tag = 'input window, operand 0']
    #allocation3 [shape = 's32[2]{0}', space=sflag, size = 0x8, scoped, tag = 'scoped memory for tpu_custom_call.1']
    #allocation4 [shape = 's32[2]{0}', space=sflag, size = 0x8, scoped, tag = 'scoped memory for tpu_custom_call.1']
    #allocation5 [shape = 'u8[16384]{0}', space=vmem, size = 0x4000, scoped, tag = 'output window, operand 0']
    %6 = vsyncpa [#allocation3], 0
    %s7 = scalar_lea.sflag [#allocation3], 1
    %8 = vsyncpa %s7, 0
    %9 = vsyncpa [#allocation4], 0
    %s10 = scalar_lea.sflag [#allocation4], 1
    %11 = vsyncpa %s10, 0
    loop: start=0, step=1, limit=4
    $region2: #{tpu_custom_call.1} parent=1 // loop_pre_header
      _
    $region3: #{tpu_custom_call.1} parent=1 // loop_header
      %s13 = sphi 0, %s17
      %p14 = scmp.ge.s32.totalorder %s13, 4
      %s23 = sphi 0, %s25
      %s26 = sphi 0, %s23
      %s27 = sphi 0, %s26
      %s43 = sphi 0, %s27
      %s49 = sphi 0, %s51
      %s52 = sphi 0, %s49
      %s53 = sphi 0, %s52
      %s69 = sphi 0, %s53
    $region4: #{tpu_custom_call.1} parent=1 // loop_header_branch
      %16 = sbr.rel (%p14) target = $region8
    $region5: #{tpu_custom_call.1} parent=1 // loop_body
      %s18 = ssub.s32 %s13, 1
      %s19 = ssub.s32 %s13, 2
      %s20 = sadd.s32 %s13, 1
      %s21 = ssub.s32 %s13, %s20
      %p22 = scmp.eq.s32.totalorder %s21, 0
      %s24 = sadd.s32 %s23, 1
      %s25 = scalar_select %p22, %s23, %s24
      %p28 = pneg %p22
      %p29 = scmp.eq.s32.totalorder %s13, 1
      %p30 = por %p28, %p29
      %p31 = scmp.ne.s32.totalorder %s23, %s26
      %p32 = scmp.eq.s32.totalorder %s13, 0
      %p33 = por %p31, %p32
      %p34 = scmp.ne.s32.totalorder %s23, %s26
      %p35 = scmp.eq.s32.totalorder %s18, 1
      %p36 = por %p34, %p35
      %p37 = scmp.ne.s32.totalorder %s26, %s27
      %p38 = scmp.eq.s32.totalorder %s18, 0
      %p39 = por %p37, %p38
      %p40 = scmp.ne.s32.totalorder %s26, %s27
      %p41 = scmp.eq.s32.totalorder %s19, 1
      %p42 = por %p40, %p41
      %p44 = scmp.ne.s32.totalorder %s27, %s43
      %p45 = scmp.eq.s32.totalorder %s19, 0
      %p46 = por %p44, %p45
      %s47 = ssub.s32 %s13, %s20
      %p48 = scmp.eq.s32.totalorder %s47, 0
      %s50 = sadd.s32 %s49, 1
      %s51 = scalar_select %p48, %s49, %s50
      %p54 = pneg %p48
      %p55 = scmp.eq.s32.totalorder %s13, 1
      %p56 = por %p54, %p55
      %p57 = scmp.ne.s32.totalorder %s49, %s52
      %p58 = scmp.eq.s32.totalorder %s13, 0
      %p59 = por %p57, %p58
      %p60 = scmp.ne.s32.totalorder %s49, %s52
      %p61 = scmp.eq.s32.totalorder %s18, 1
      %p62 = por %p60, %p61
      %p63 = scmp.ne.s32.totalorder %s52, %s53
      %p64 = scmp.eq.s32.totalorder %s18, 0
      %p65 = por %p63, %p64
      %p66 = scmp.ne.s32.totalorder %s52, %s53
      %p67 = scmp.eq.s32.totalorder %s19, 1
      %p68 = por %p66, %p67
      %p70 = scmp.ne.s32.totalorder %s53, %s69
      %p71 = scmp.eq.s32.totalorder %s19, 0
      %p72 = por %p70, %p71
      %p73 = scmp.le.s32.totalorder 1, %s13
      %p74 = scmp.lt.s32.totalorder %s13, 3
      %p75 = pnand %p73, %p74
      %p76 = pneg %p75
      // Predicated region
      $region9: #{tpu_custom_call.1} parent=5 // pred_check
        _
      $region10: #{tpu_custom_call.1} parent=5 // pred_check_branch
        %78 = sbr.rel (%p75) target = $region12
      $region11: #{tpu_custom_call.1} parent=5 // pred_region
        %s79 = ssub.s32 %s13, 1
      $region12: #{tpu_custom_call.1} parent=5 // pred_fallthru
        _
      %p80 = scmp.lt.s32.totalorder %s13, 2
      // Predicated region
      $region13: #{tpu_custom_call.1} parent=5 // pred_check
        %p81 = pneg %p80
      $region14: #{tpu_custom_call.1} parent=5 // pred_check_branch
        %83 = sbr.rel (%p81) target = $region16
      $region15: #{tpu_custom_call.1} parent=5 // pred_region
        // Predicated region
        $region17: #{tpu_custom_call.1} parent=15 // pred_check
          %p84 = pneg %p33
        $region18: #{tpu_custom_call.1} parent=15 // pred_check_branch
          %86 = sbr.rel (%p84) target = $region20
        $region19: #{tpu_custom_call.1} parent=15 // pred_region
          %s87 = sand.u32 %s23, 1
          %s88 = scalar_lea.sflag [#allocation3], %s87
          %s89 = sand.u32 %s23, 1
          %s90 = smul.addr %s89, 64
          %s91 = scalar_lea.vmem [#allocation2], %s90
          %93 = vsyncadd %s88, 0
          %s94 = smul.addr %s13, 8
          %s95 = smul.addr %s94, 8
          %s96 = scalar_lea.hbm %s0, %s95
          %s97 = sshll.u32 %s96, 4
          %s98 = int_to_ptr.hbm [resolvable:$true] %s97
          %s99 = sshll.u32 %s91, 4
          %s100 = int_to_ptr.vmem [resolvable:$true] %s99
          %105 = dma.hbm_to_vmem [thread:$0]  %s98, 1024, %s100, %s88, 128, 128, 8
        $region20: #{tpu_custom_call.1} parent=15 // pred_fallthru
          _
      $region16: #{tpu_custom_call.1} parent=5 // pred_fallthru
        _
      %p106 = scmp.le.s32.totalorder 1, %s13
      %p107 = scmp.lt.s32.totalorder %s13, 3
      %p108 = pnand %p106, %p107
      %p109 = pneg %p108
      // Predicated region
      $region21: #{tpu_custom_call.1} parent=5 // pred_check
        _
      $region22: #{tpu_custom_call.1} parent=5 // pred_check_branch
        %111 = sbr.rel (%p108) target = $region24
      $region23: #{tpu_custom_call.1} parent=5 // pred_region
        %s112 = ssub.s32 %s13, 1
        %s113 = sand.u32 %s26, 1
        %s114 = scalar_lea.sflag [#allocation3], %s113
        %s115 = sand.u32 %s26, 1
        %s116 = smul.addr %s115, 64
        %s117 = scalar_lea.vmem [#allocation2], %s116
        // Predicated region
        $region25: #{tpu_custom_call.1} parent=23 // pred_check
          %p118 = pneg %p39
        $region26: #{tpu_custom_call.1} parent=23 // pred_check_branch
          %120 = sbr.rel (%p118) target = $region28
        $region27: #{tpu_custom_call.1} parent=23 // pred_region
          %122 = dma.done %s114, 1024
        $region28: #{tpu_custom_call.1} parent=23 // pred_fallthru
          _
        %s123 = sand.u32 %s26, 1
        %s124 = scalar_lea.sflag [#allocation3], %s123
        %s125 = sand.u32 %s26, 1
        %s126 = smul.addr %s125, 64
        %s127 = scalar_lea.vmem [#allocation2], %s126
        %p128 = pneg %p39
        %p129 = pneg %p36
        %p130 = pneg %p65
        %p131 = pneg %p62
        %s132 = sand.u32 %s52, 1
        %s133 = scalar_lea.sflag [#allocation4], %s132
        %s134 = sand.u32 %s52, 1
        %s135 = smul.addr %s134, 16
        %s136 = scalar_lea.vmem [#allocation5], %s135
        %v137 = vld [vmem:[%s117] sm:$0xff]
        %v138 = vld [vmem:[%s117 + $0x8] sm:$0xff]
        %v139 = vrot.slane %v137, 1
        %v140 = vrot.slane %v138, 1
        %v141 = vlaneseq
        %v142 = vshrl.u32 %v141, 7
        %vm143 = vcmp.lt.s32.totalorder %v142, 7
        %v144 = vsel %vm143, %v139, %v140
        %v145 = vsel %vm143, %v140, %v139
        %v146 = vsub.f32 %v144, %v137
        %v147 = vsub.f32 %v145, %v138
        %148 = vrot.lane.b32.xlu0 %v137, 127
        %v149 = vpop.permute.xlu0 %148
        %150 = vrot.lane.b32.xlu0 %v138, 127
        %v151 = vpop.permute.xlu0 %150
        %v152 = vsub.f32 %v149, %v137
        %v153 = vsub.f32 %v151, %v138
        %v154 = vand.u32 2147483647, %v146
        %v155 = vand.u32 2147483647, %v147
        %v156 = vadd.f32 %v154, 0.0
        %v157 = vadd.f32 %v155, 0.0
        %v158 = vand.u32 2147483647, %v152
        %v159 = vand.u32 2147483647, %v153
        %v160 = vadd.f32 %v158, 0.0
        %v161 = vadd.f32 %v159, 0.0
        %s162 = scalar_lea.vmem %s117, 16 [#allocation2]
        %v163 = vld [vmem:[%s162] sm:$0xff]
        %v164 = vld [vmem:[%s162 + $0x8] sm:$0xff]
        %v165 = vrot.slane %v163, 1
        %v166 = vrot.slane %v164, 1
        %v167 = vsel %vm143, %v165, %v166
        %v168 = vsel %vm143, %v166, %v165
        %v169 = vsub.f32 %v167, %v163
        %v170 = vsub.f32 %v168, %v164
        %171 = vrot.lane.b32.xlu0 %v163, 127
        %v172 = vpop.permute.xlu0 %171
        %173 = vrot.lane.b32.xlu0 %v164, 127
        %v174 = vpop.permute.xlu0 %173
        %v175 = vsub.f32 %v172, %v163
        %v176 = vsub.f32 %v174, %v164
        %v177 = vand.u32 2147483647, %v169
        %v178 = vand.u32 2147483647, %v170
        %v179 = vadd.f32 %v156, %v177
        %v180 = vadd.f32 %v157, %v178
        %v181 = vand.u32 2147483647, %v175
        %v182 = vand.u32 2147483647, %v176
        %v183 = vadd.f32 %v160, %v181
        %v184 = vadd.f32 %v161, %v182
        %s185 = scalar_lea.vmem %s117, 32 [#allocation2]
        %v186 = vld [vmem:[%s185] sm:$0xff]
        %v187 = vld [vmem:[%s185 + $0x8] sm:$0xff]
        %v188 = vrot.slane %v186, 1
        %v189 = vrot.slane %v187, 1
        %v190 = vsel %vm143, %v188, %v189
        %v191 = vsel %vm143, %v189, %v188
        %v192 = vsub.f32 %v190, %v186
        %v193 = vsub.f32 %v191, %v187
        %194 = vrot.lane.b32.xlu0 %v186, 127
        %v195 = vpop.permute.xlu0 %194
        %196 = vrot.lane.b32.xlu0 %v187, 127
        %v197 = vpop.permute.xlu0 %196
        %v198 = vsub.f32 %v195, %v186
        %v199 = vsub.f32 %v197, %v187
        %v200 = vand.u32 2147483647, %v192
        %v201 = vand.u32 2147483647, %v193
        %v202 = vadd.f32 %v179, %v200
        %v203 = vadd.f32 %v180, %v201
        %v204 = vand.u32 2147483647, %v198
        %v205 = vand.u32 2147483647, %v199
        %v206 = vadd.f32 %v183, %v204
        %v207 = vadd.f32 %v184, %v205
        %s208 = scalar_lea.vmem %s117, 48 [#allocation2]
        %v209 = vld [vmem:[%s208] sm:$0xff]
        %v210 = vld [vmem:[%s208 + $0x8] sm:$0xff]
        %v211 = vrot.slane %v209, 1
        %v212 = vrot.slane %v210, 1
        %v213 = vsel %vm143, %v211, %v212
        %v214 = vsel %vm143, %v212, %v211
        %v215 = vsub.f32 %v213, %v209
        %v216 = vsub.f32 %v214, %v210
        %217 = vrot.lane.b32.xlu0 %v209, 127
        %v218 = vpop.permute.xlu0 %217
        %219 = vrot.lane.b32.xlu0 %v210, 127
        %v220 = vpop.permute.xlu0 %219
        %v221 = vsub.f32 %v218, %v209
        %v222 = vsub.f32 %v220, %v210
        %v223 = vand.u32 2147483647, %v215
        %v224 = vand.u32 2147483647, %v216
        %v225 = vadd.f32 %v202, %v223
        %v226 = vadd.f32 %v203, %v224
        %v227 = vand.u32 2147483647, %v221
        %v228 = vand.u32 2147483647, %v222
        %v229 = vadd.f32 %v206, %v227
        %v230 = vadd.f32 %v207, %v228
        %v231 = vadd.s32 %v142, 8
        %v232 = vlaneseq
        %v233 = vand.u32 %v232, 127
        %vm234 = vcmp.lt.s32.totalorder %v142, 15
        %vm235 = vcmp.lt.s32.totalorder %v231, 15
        %v236 = vsel %vm234, 1, 0
        %v237 = vsel %vm235, 1, 0
        %v238 = vcvt.s32.f32 %v236
        %v239 = vcvt.s32.f32 %v237
        %vm240 = vcmp.lt.s32.totalorder %v233, 127
        %v241 = vsel %vm240, 1, 0
        %v242 = vcvt.s32.f32 %v241
        %vm243 = vcmp.eq.s32.totalorder %v142, 0
        %vm244 = vcmp.eq.s32.totalorder %v231, 0
        %vm245 = vcmp.eq.s32.totalorder %v142, 15
        %vm246 = vcmp.eq.s32.totalorder %v231, 15
        %vm247 = vmor %vm243, %vm245
        %vm248 = vmor %vm244, %vm246
        %v249 = vsel %vm247, 1.0, 0.5
        %v250 = vsel %vm248, 1.0, 0.5
        %vm251 = vcmp.eq.s32.totalorder %v233, 0
        %vm252 = vcmp.eq.s32.totalorder %v233, 127
        %vm253 = vmor %vm251, %vm252
        %v254 = vsel %vm253, 1.0, 0.5
        %v255 = vmul.f32 %v225, %v238
        %v256 = vmul.f32 %v226, %v239
        %v257 = vmul.f32 %v229, %v242
        %v258 = vmul.f32 %v230, %v242
        %v259 = vrot.slane %v255, 7
        %v260 = vrot.slane %v256, 7
        %vm261 = vcmp.lt.s32.totalorder %v142, 1
        %v262 = vsel %vm261, %v259, %v260
        %v263 = vsel %vm261, %v260, %v259
        %v264 = vadd.f32 %v255, %v263
        %v265 = vadd.f32 %v256, %v262
        %v266 = vmul.f32 %v264, %v249
        %v267 = vmul.f32 %v265, %v250
        %268 = vrot.lane.b32.xlu0 %v257, 1
        %v269 = vpop.permute.xlu0 %268
        %270 = vrot.lane.b32.xlu0 %v258, 1
        %v271 = vpop.permute.xlu0 %270
        %v272 = vadd.f32 %v257, %v269
        %v273 = vadd.f32 %v258, %v271
        %v274 = vmul.f32 %v272, %v254
        %v275 = vmul.f32 %v273, %v254
        %v276 = vadd.f32 %v266, %v274
        %v277 = vadd.f32 %v267, %v275
        %278 = vst [vmem:[%s136] sm:$0xff] %v276
        %279 = vst [vmem:[%s136 + $0x8] sm:$0xff] %v277
        %s280 = sand.u32 %s52, 1
        %s281 = scalar_lea.sflag [#allocation4], %s280
        %s282 = sand.u32 %s52, 1
        %s283 = smul.addr %s282, 16
        %s284 = scalar_lea.vmem [#allocation5], %s283
        // Predicated region
        $region29: #{tpu_custom_call.1} parent=23 // pred_check
          %p285 = pneg %p62
        $region30: #{tpu_custom_call.1} parent=23 // pred_check_branch
          %287 = sbr.rel (%p285) target = $region32
        $region31: #{tpu_custom_call.1} parent=23 // pred_region
          %289 = vsyncadd %s281, 0
          %s290 = smul.addr %s18, 2
          %s291 = smul.addr %s290, 8
          %s292 = scalar_lea.hbm %s1, %s291
          %s293 = sshll.u32 %s284, 4
          %s294 = int_to_ptr.vmem [resolvable:$true] %s293
          %s295 = sshll.u32 %s292, 4
          %s296 = int_to_ptr.hbm [resolvable:$true] %s295
          %301 = dma.vmem_to_hbm [thread:$0]  %s294, 256, %s296, %s281, 128, 128, 8
        $region32: #{tpu_custom_call.1} parent=23 // pred_fallthru
          _
      $region24: #{tpu_custom_call.1} parent=5 // pred_fallthru
        _
      %p302 = scmp.le.s32.totalorder 2, %s13
      // Predicated region
      $region33: #{tpu_custom_call.1} parent=5 // pred_check
        %p303 = pneg %p302
      $region34: #{tpu_custom_call.1} parent=5 // pred_check_branch
        %305 = sbr.rel (%p303) target = $region36
      $region35: #{tpu_custom_call.1} parent=5 // pred_region
        %s306 = ssub.s32 %s13, 2
        // Predicated region
        $region37: #{tpu_custom_call.1} parent=35 // pred_check
          %p307 = pneg %p68
        $region38: #{tpu_custom_call.1} parent=35 // pred_check_branch
          %309 = sbr.rel (%p307) target = $region40
        $region39: #{tpu_custom_call.1} parent=35 // pred_region
          %s310 = sand.u32 %s53, 1
          %s311 = scalar_lea.sflag [#allocation4], %s310
          %s312 = sand.u32 %s53, 1
          %s313 = smul.addr %s312, 16
          %s314 = scalar_lea.vmem [#allocation5], %s313
          %316 = dma.done %s311, 256
        $region40: #{tpu_custom_call.1} parent=35 // pred_fallthru
          _
      $region36: #{tpu_custom_call.1} parent=5 // pred_fallthru
        _
    $region6: #{tpu_custom_call.1} parent=1 // loop_footer
      %s17 = sadd.s32 1, %s13
    $region7: #{tpu_custom_call.1} parent=1 // loop_footer_branch
      %12 = sbr.rel target = $region3
    $region8: #{tpu_custom_call.1} parent=1 // loop_exit
      _
    %317 = vsyncpa [#allocation3], 1
    %s318 = scalar_lea.sflag [#allocation3], 1
    %319 = vsyncpa %s318, 1
    %320 = vsyncpa [#allocation4], 1
    %s321 = scalar_lea.sflag [#allocation4], 1
    %322 = vsyncpa %s321, 1

</llo_original>
